<compile_context>
chip_gen: v6e
topology: v6e:2x2x1
jax: 0.10.0
libtpu: 0.0.40
codegen_flags: <defaults>
</compile_context>

<pallas_src>
import functools

import jax
import jax.numpy as jnp
from jax.experimental import pallas as pl
from jax.experimental.pallas import tpu as pltpu


def _layerwise_softmax_kernel(x_ref, o_ref, *, inv_temp):
    # Block: (NB, C, THW). Softmax over axis=1 (channels, sublane axis);
    # the HW axis is lane-dense and every column is independent.
    x = x_ref[...].astype(jnp.float32)
    if inv_temp != 1.0:  # trace-time Python constant -> no extra VPU pass when T == 1
        x = x * inv_temp
    m = jnp.max(x, axis=1, keepdims=True)
    e = jnp.exp(x - m)
    s = jnp.sum(e, axis=1, keepdims=True)
    # One reciprocal per (NB, 1, THW) column + broadcast multiply instead of a
    # full-tile divide. The kernel is HBM-bound; compute tweaks beyond this are noise.
    inv_s = pl.reciprocal(s, approx=False)
    o_ref[...] = (e * inv_s).astype(o_ref.dtype)


def _round_up(v, m):
    return (v + m - 1) // m * m


def _ceil_div(a, b):
    return -(-a // b)


def layerwise_softmax(x, temperature: float = 1.0):
    """Pallas equivalent of F.softmax(x / temperature, dim=1) for NCHW inputs."""
    N, C, H, W = x.shape
    HW = H * W
    itemsize = jnp.dtype(x.dtype).itemsize
    LANE = 128

    # ---- Generation-aware VMEM budget (v5e/v6e: 128 MiB, v7x: 64 MiB) -----
    try:
        vmem_cap = int(pltpu.get_tpu_info().vmem_capacity_bytes)
    except Exception:
        vmem_cap = 64 * 1024 * 1024  # conservative (v7x-sized) fallback
    vmem_limit = min(vmem_cap * 3 // 4, 96 * 1024 * 1024)
    tile_budget = min(vmem_limit // 2, 32 * 1024 * 1024)

    # Target per-block input traffic: sit at the block-size knee of the HBM roofline.
    # v7x (smaller VMEM, ~3.2 TB/s HBM) needs bigger blocks to amortize the ~0.35us
    # per-grid-step overhead; v5e/v6e are happy at ~2 MiB.
    if vmem_cap <= 64 * 1024 * 1024:
        target_block_bytes = 4 * 1024 * 1024
    else:
        target_block_bytes = 2 * 1024 * 1024

    # Per lane-column VMEM footprint, accounting for sublane padding:
    #   2x double-buffered input + 2x double-buffered output (dtype, padded to the
    #   dtype sublane multiple) + ~2 f32 temporaries (padded to 8 sublanes).
    sub = max(8, 32 // itemsize)          # 8 for f32, 16 for bf16, 32 for int8/fp8
    c_pad = _round_up(C, sub)
    c_f32 = _round_up(C, 8)
    per_col_bytes = c_pad * 4 * itemsize + c_f32 * 8

    max_cols_vmem = max(LANE, (tile_budget // per_col_bytes) // LANE * LANE)

    # ---- Spatial tile: lane-dense multiple of 128 (or the full HW dim) ------
    if HW <= LANE:
        THW = HW  # full array dim -> allowed even if not a multiple of 128
    else:
        desired_cols = _round_up(
            max(LANE, target_block_bytes // max(1, C * itemsize)), LANE
        )
        THW = max(LANE, min(_round_up(HW, LANE), max_cols_vmem, desired_cols))

    # ---- Fold batch elements per block when blocks are small (amortize per-step
    # overhead and the C<8 sublane waste). No divisibility requirement: tail blocks
    # are handled by cdiv grids + partial-block masking. -----------------------
    block_in_bytes = C * THW * itemsize
    NB = 1
    if N > 1 and block_in_bytes < target_block_bytes:
        max_nb_vmem = max(1, tile_budget // (per_col_bytes * THW))
        max_nb_target = max(1, target_block_bytes // block_in_bytes)
        NB = int(min(N, max_nb_vmem, max_nb_target))

    grid_n = _ceil_div(N, NB)
    grid_hw = _ceil_div(HW, THW)

    # Don't collapse to a single grid step when it's avoidable: keeps both
    # TensorCores busy on multi-core chips (cost on single-TC chips is one extra
    # ~0.35us step, negligible).
    if grid_n * grid_hw < 2:
        if N >= 2:
            NB = _ceil_div(N, 2)
            grid_n = _ceil_div(N, NB)
        elif HW > LANE and THW > LANE:
            THW = _round_up(_ceil_div(HW, 2), LANE)
            grid_hw = _ceil_div(HW, THW)

    grid = (grid_n, grid_hw)

    # No host-side pad / slice-back: the kernel reads/writes the tensor exactly once.
    x2 = x.reshape(N, C, HW)

    # Advisory cost: use the (block-rounded) element count actually processed.
    total_padded = grid_n * NB * C * grid_hw * THW
    cost = pl.CostEstimate(
        flops=5 * total_padded,
        transcendentals=total_padded,
        bytes_accessed=2 * total_padded * itemsize,
    )

    out = pl.pallas_call(
        functools.partial(
            _layerwise_softmax_kernel, inv_temp=1.0 / float(temperature)
        ),
        out_shape=jax.ShapeDtypeStruct((N, C, HW), x.dtype),
        grid=grid,
        in_specs=[pl.BlockSpec((NB, C, THW), lambda n, h: (n, 0, h))],
        out_specs=pl.BlockSpec((NB, C, THW), lambda n, h: (n, 0, h)),
        compiler_params=pltpu.CompilerParams(
            # Both axes are fully independent (the reduction is inside the block).
            dimension_semantics=("parallel", "parallel"),
            vmem_limit_bytes=int(vmem_limit),
        ),
        cost_estimate=cost,
    )(x2)

    return out.reshape(N, C, H, W)


if __name__ == "__main__":
    # LayerwiseSoftmax has no learned parameters; temperature is a constant.
    key = jax.random.PRNGKey(0)

    # Primary check: shape from the module spec, temperature = 1.0.
    x = jax.random.normal(key, (2, 4, 16, 16), dtype=jnp.float32)  # NCHW
    y = jax.block_until_ready(layerwise_softmax(x, temperature=1.0))
    y_ref = jax.nn.softmax(x / 1.0, axis=1)
    assert y.shape == x.shape and y.dtype == x.dtype
    assert jnp.allclose(y, y_ref, atol=1e-6), "mismatch vs reference softmax (T=1)"

    # Secondary check: non-unit temperature and HW < 128 (full-dim spatial block,
    # no padding anywhere).
    x2 = jax.random.normal(jax.random.PRNGKey(1), (2, 8, 10, 10), dtype=jnp.float32)
    y2 = jax.block_until_ready(layerwise_softmax(x2, temperature=2.0))
    y2_ref = jax.nn.softmax(x2 / 2.0, axis=1)
    assert jnp.allclose(y2, y2_ref, atol=1e-6), "mismatch vs reference softmax (T=2)"

    # Third check: N=1 with ragged HW > 128 (exercises the cdiv partial-tile path
    # and the grid split that keeps >= 2 grid steps).
    x3 = jax.random.normal(jax.random.PRNGKey(2), (1, 4, 12, 12), dtype=jnp.float32)
    y3 = jax.block_until_ready(layerwise_softmax(x3, temperature=0.5))
    y3_ref = jax.nn.softmax(x3 / 0.5, axis=1)
    assert jnp.allclose(y3, y3_ref, atol=1e-6), "mismatch vs reference softmax (T=0.5)"

    print("KERNEL_OK")
</pallas_src>

<mosaic_0001>
module attributes {stable_mosaic.version = 11 : i64} {
  func.func @_layerwise_softmax_kernel(%arg0: i32, %arg1: i32, %arg2: memref<1x4x256xf32, #tpu.memory_space<vmem>>, %arg3: memref<1x4x256xf32, #tpu.memory_space<vmem>>) attributes {dimension_semantics = [#tpu.dimension_semantics<parallel>, #tpu.dimension_semantics<parallel>], iteration_bounds = array<i64: 2, 1>, scalar_prefetch = 0 : i64, scratch_operands = 0 : i64, tpu.core_type = #tpu.core_type<tc>, window_params = [{transform_indices = @transform_0, window_bounds = array<i64: 1, 4, 256>}, {transform_indices = @transform_1, window_bounds = array<i64: 1, 4, 256>}]} {
    %c0 = arith.constant 0 : index
    %c0_0 = arith.constant 0 : index
    %c0_1 = arith.constant 0 : index
    %0 = vector.load %arg2[%c0, %c0_0, %c0_1] : memref<1x4x256xf32, #tpu.memory_space<vmem>>, vector<1x4x256xf32>
    %cst = arith.constant dense<0xFF800000> : vector<1x256xf32>
    %1 = vector.multi_reduction <maximumf>, %0, %cst [1] : vector<1x4x256xf32> to vector<1x256xf32>
    %2 = vector.shape_cast %1 : vector<1x256xf32> to vector<1x1x256xf32>
    %3 = vector.broadcast %2 : vector<1x1x256xf32> to vector<1x4x256xf32>
    %4 = arith.subf %0, %3 : vector<1x4x256xf32>
    %5 = math.exp %4 : vector<1x4x256xf32>
    %cst_2 = arith.constant dense<0.000000e+00> : vector<1x256xf32>
    %6 = vector.multi_reduction <add>, %5, %cst_2 [1] : vector<1x4x256xf32> to vector<1x256xf32>
    %7 = vector.shape_cast %6 : vector<1x256xf32> to vector<1x1x256xf32>
    %8 = tpu.reciprocal %7 : vector<1x1x256xf32> -> vector<1x1x256xf32>
    %9 = vector.broadcast %8 : vector<1x1x256xf32> to vector<1x4x256xf32>
    %10 = arith.mulf %5, %9 : vector<1x4x256xf32>
    %c0_3 = arith.constant 0 : index
    %c0_4 = arith.constant 0 : index
    %c0_5 = arith.constant 0 : index
    %11 = vector.load %arg3[%c0_3, %c0_4, %c0_5] : memref<1x4x256xf32, #tpu.memory_space<vmem>>, vector<1x4x256xf32>
    tpu.vector_store %arg3[%c0_3, %c0_4, %c0_5], %10 {strides = array<i32>} : memref<1x4x256xf32, #tpu.memory_space<vmem>>, vector<1x4x256xf32>,
    return
  }
  func.func @transform_0(%arg0: i32, %arg1: i32) -> (i32, i32, i32) {
    %c0_i32 = arith.constant 0 : i32
    %c0_i32_0 = arith.constant 0 : i32
    return %arg0, %c0_i32, %arg1 : i32, i32, i32
  }
  func.func @transform_1(%arg0: i32, %arg1: i32) -> (i32, i32, i32) {
    %c0_i32 = arith.constant 0 : i32
    %c0_i32_0 = arith.constant 0 : i32
    return %arg0, %c0_i32, %arg1 : i32, i32, i32
  }
}

</mosaic_0001>

<llo_original>
// kernel: tpu_custom_call.1
$region0: #{tpu_custom_call.1}
  #allocation0 [shape = 'u32[]', space=smem, size = 0x4, offset = 0x4, fixed_abs, tag = 'smem constant byte address 0x4 - core index']
  #allocation1 [shape = 'u32[144,128]{1,0:T(1,128)}', space=vmem, size = 0x12000, scoped, tag = 'internal scratch']
  %s0 = inlined_call_operand.hbm [shape: f32[2,4,256], index: 0, kind: input, shape index: {}]
  %s1 = inlined_call_operand.hbm [shape: f32[2,4,256], index: 1, kind: output, shape index: {}]
  %s2 = sld [smem:[#allocation0]]
  $region41: #{tpu_custom_call.1} parent=0
    _
  %s4 = ssub.s32 1, %s2
  %s5 = scalar_select 0, %s4, %s2
  $region1: #{tpu_custom_call.1} parent=0
    #allocation2 [shape = 'u8[8192]{0}', space=vmem, size = 0x2000, scoped, tag = 'input window, operand 0']
    #allocation3 [shape = 's32[2]{0}', space=sflag, size = 0x8, scoped, tag = 'scoped memory for tpu_custom_call.1']
    #allocation4 [shape = 's32[2]{0}', space=sflag, size = 0x8, scoped, tag = 'scoped memory for tpu_custom_call.1']
    #allocation5 [shape = 'u8[8192]{0}', space=vmem, size = 0x2000, scoped, tag = 'output window, operand 0']
    %6 = vsyncpa [#allocation3], 0
    %s7 = scalar_lea.sflag [#allocation3], 1
    %8 = vsyncpa %s7, 0
    %9 = vsyncpa [#allocation4], 0
    %s10 = scalar_lea.sflag [#allocation4], 1
    %11 = vsyncpa %s10, 0
    loop: start=0, step=1, limit=4
    $region2: #{tpu_custom_call.1} parent=1 // loop_pre_header
      _
    $region3: #{tpu_custom_call.1} parent=1 // loop_header
      %s13 = sphi 0, %s17
      %p14 = scmp.ge.s32.totalorder %s13, 4
      %s20 = sphi 0, %s32
      %s21 = sphi 0, %s28
      %s22 = sphi 0, %s20
      %s23 = sphi 0, %s21
      %s24 = sphi 0, %s22
      %s25 = sphi 0, %s23
      %s37 = sphi 0, %s39
      %s40 = sphi 0, %s37
      %s41 = sphi 0, %s40
      %s57 = sphi 0, %s41
      %s65 = sphi 0, %s67
      %s68 = sphi 0, %s65
      %s69 = sphi 0, %s68
      %s85 = sphi 0, %s69
    $region4: #{tpu_custom_call.1} parent=1 // loop_header_branch
      %16 = sbr.rel (%p14) target = $region8
    $region5: #{tpu_custom_call.1} parent=1 // loop_body
      %s18 = ssub.s32 %s13, 1
      %s19 = ssub.s32 %s13, 2
      %s26 = sadd.s32 1, %s21
      %p27 = scmp.ge.s32.totalorder %s26, 1
      %s28 = scalar_select %p27, 0, %s26
      %s29 = sadd.s32 1, %s20
      %s30 = scalar_select %p27, %s29, %s20
      %p31 = scmp.ge.s32.totalorder %s30, 2
      %s32 = scalar_select %p31, 0, %s30
      %s33 = ssub.s32 %s20, %s32
      %s34 = ssub.s32 %s21, %s28
      %s35 = sor.u32 %s33, %s34
      %p36 = scmp.eq.s32.totalorder %s35, 0
      %s38 = sadd.s32 %s37, 1
      %s39 = scalar_select %p36, %s37, %s38
      %p42 = pneg %p36
      %p43 = scmp.eq.s32.totalorder %s13, 1
      %p44 = por %p42, %p43
      %p45 = scmp.ne.s32.totalorder %s37, %s40
      %p46 = scmp.eq.s32.totalorder %s13, 0
      %p47 = por %p45, %p46
      %p48 = scmp.ne.s32.totalorder %s37, %s40
      %p49 = scmp.eq.s32.totalorder %s18, 1
      %p50 = por %p48, %p49
      %p51 = scmp.ne.s32.totalorder %s40, %s41
      %p52 = scmp.eq.s32.totalorder %s18, 0
      %p53 = por %p51, %p52
      %p54 = scmp.ne.s32.totalorder %s40, %s41
      %p55 = scmp.eq.s32.totalorder %s19, 1
      %p56 = por %p54, %p55
      %p58 = scmp.ne.s32.totalorder %s41, %s57
      %p59 = scmp.eq.s32.totalorder %s19, 0
      %p60 = por %p58, %p59
      %s61 = ssub.s32 %s20, %s32
      %s62 = ssub.s32 %s21, %s28
      %s63 = sor.u32 %s61, %s62
      %p64 = scmp.eq.s32.totalorder %s63, 0
      %s66 = sadd.s32 %s65, 1
      %s67 = scalar_select %p64, %s65, %s66
      %p70 = pneg %p64
      %p71 = scmp.eq.s32.totalorder %s13, 1
      %p72 = por %p70, %p71
      %p73 = scmp.ne.s32.totalorder %s65, %s68
      %p74 = scmp.eq.s32.totalorder %s13, 0
      %p75 = por %p73, %p74
      %p76 = scmp.ne.s32.totalorder %s65, %s68
      %p77 = scmp.eq.s32.totalorder %s18, 1
      %p78 = por %p76, %p77
      %p79 = scmp.ne.s32.totalorder %s68, %s69
      %p80 = scmp.eq.s32.totalorder %s18, 0
      %p81 = por %p79, %p80
      %p82 = scmp.ne.s32.totalorder %s68, %s69
      %p83 = scmp.eq.s32.totalorder %s19, 1
      %p84 = por %p82, %p83
      %p86 = scmp.ne.s32.totalorder %s69, %s85
      %p87 = scmp.eq.s32.totalorder %s19, 0
      %p88 = por %p86, %p87
      %p89 = scmp.le.s32.totalorder 1, %s13
      %p90 = scmp.lt.s32.totalorder %s13, 3
      %p91 = pnand %p89, %p90
      %p92 = pneg %p91
      // Predicated region
      $region9: #{tpu_custom_call.1} parent=5 // pred_check
        _
      $region10: #{tpu_custom_call.1} parent=5 // pred_check_branch
        %94 = sbr.rel (%p91) target = $region12
      $region11: #{tpu_custom_call.1} parent=5 // pred_region
        %s95 = ssub.s32 %s13, 1
      $region12: #{tpu_custom_call.1} parent=5 // pred_fallthru
        _
      %p96 = scmp.lt.s32.totalorder %s13, 2
      // Predicated region
      $region13: #{tpu_custom_call.1} parent=5 // pred_check
        %p97 = pneg %p96
      $region14: #{tpu_custom_call.1} parent=5 // pred_check_branch
        %99 = sbr.rel (%p97) target = $region16
      $region15: #{tpu_custom_call.1} parent=5 // pred_region
        // Predicated region
        $region17: #{tpu_custom_call.1} parent=15 // pred_check
          %p100 = pneg %p47
        $region18: #{tpu_custom_call.1} parent=15 // pred_check_branch
          %102 = sbr.rel (%p100) target = $region20
        $region19: #{tpu_custom_call.1} parent=15 // pred_region
          %s103 = sand.u32 %s37, 1
          %s104 = scalar_lea.sflag [#allocation3], %s103
          %s105 = sand.u32 %s37, 1
          %s106 = smul.addr %s105, 8
          %s107 = scalar_lea.vmem [#allocation2], %s106
          %s108 = smul.u32 2, %s21
          %s110 = ssub.s32 128, 128
          %111 = vsyncadd %s104, %s110
          %s112 = smul.addr %s20, 2
          %s113 = sadd.s32 %s108, %s112
          %s114 = smul.addr %s113, 64
          %s115 = scalar_lea.hbm %s0, %s114
          %s117 = sshll.u32 %s107, 4
          %s118 = int_to_ptr.vmem [resolvable:$true] %s117
          %120 = dma.hbm_to_vmem [thread:$0]  %s115, 128, %s118, %s104
        $region20: #{tpu_custom_call.1} parent=15 // pred_fallthru
          _
      $region16: #{tpu_custom_call.1} parent=5 // pred_fallthru
        _
      %p121 = scmp.le.s32.totalorder 1, %s13
      %p122 = scmp.lt.s32.totalorder %s13, 3
      %p123 = pnand %p121, %p122
      %p124 = pneg %p123
      // Predicated region
      $region21: #{tpu_custom_call.1} parent=5 // pred_check
        _
      $region22: #{tpu_custom_call.1} parent=5 // pred_check_branch
        %126 = sbr.rel (%p123) target = $region24
      $region23: #{tpu_custom_call.1} parent=5 // pred_region
        %s127 = ssub.s32 %s13, 1
        %s128 = sand.u32 %s40, 1
        %s129 = scalar_lea.sflag [#allocation3], %s128
        %s130 = sand.u32 %s40, 1
        %s131 = smul.addr %s130, 8
        %s132 = scalar_lea.vmem [#allocation2], %s131
        // Predicated region
        $region25: #{tpu_custom_call.1} parent=23 // pred_check
          %p133 = pneg %p53
        $region26: #{tpu_custom_call.1} parent=23 // pred_check_branch
          %135 = sbr.rel (%p133) target = $region28
        $region27: #{tpu_custom_call.1} parent=23 // pred_region
          %136 = dma.done %s129, 128
        $region28: #{tpu_custom_call.1} parent=23 // pred_fallthru
          _
        %s137 = sand.u32 %s40, 1
        %s138 = scalar_lea.sflag [#allocation3], %s137
        %s139 = sand.u32 %s40, 1
        %s140 = smul.addr %s139, 8
        %s141 = scalar_lea.vmem [#allocation2], %s140
        %p142 = pneg %p53
        %p143 = pneg %p50
        %p144 = pneg %p81
        %p145 = pneg %p78
        %s146 = sand.u32 %s68, 1
        %s147 = scalar_lea.sflag [#allocation4], %s146
        %s148 = sand.u32 %s68, 1
        %s149 = smul.addr %s148, 8
        %s150 = scalar_lea.vmem [#allocation5], %s149
        %s151 = smul.u32 2, %s23
        %s152 = smul.u32 2, %s23
        %v153 = vld [vmem:[%s132] sm:$0xff]
        %v155 = vcombine.high %v153, %v153
        %vm157 = vcmask 1043456
        %v158 = vsel %vm157, %v153, -inf
        %v159 = vrot.slane %v158, 4
        %v160 = vmax.f32 %v158, %v159
        %v161 = vrot.slane %v160, 2
        %v162 = vmax.f32 %v160, %v161
        %v163 = vrot.slane %v162, 1
        %v164 = vmax.f32 %v162, %v163
        %v165 = vsel %vm157, %v155, -inf
        %v166 = vrot.slane %v165, 4
        %v167 = vmax.f32 %v165, %v166
        %v168 = vrot.slane %v167, 2
        %v169 = vmax.f32 %v167, %v168
        %v170 = vrot.slane %v169, 1
        %v171 = vmax.f32 %v169, %v170
        %v174 = vcombine.low %v164, %v171
        %v176 = vsub.f32 %v153, %v174
        %v177 = vmul.f32 %v176, 1.442695
        %v178 = vpow.pop %v177
        %v180 = vcombine.high %v178, %v178
        %v182 = vsel %vm157, %v178, 0.0
        %v183 = vrot.slane %v182, 4
        %v184 = vadd.f32 %v182, %v183
        %v185 = vrot.slane %v184, 2
        %v186 = vadd.f32 %v184, %v185
        %v187 = vrot.slane %v186, 1
        %v188 = vadd.f32 %v186, %v187
        %v189 = vsel %vm157, %v180, 0.0
        %v190 = vrot.slane %v189, 4
        %v191 = vadd.f32 %v189, %v190
        %v192 = vrot.slane %v191, 2
        %v193 = vadd.f32 %v191, %v192
        %v194 = vrot.slane %v193, 1
        %v195 = vadd.f32 %v193, %v194
        %v196 = vrcp.pop %v188
        %v197 = vrcp.pop %v195
        %v200 = vcombine.low %v196, %v197
        %v202 = vmul.f32 %v178, %v200
        %203 = vst [vmem:[%s150] sm:$0xff] %v202
        %s204 = sand.u32 %s68, 1
        %s205 = scalar_lea.sflag [#allocation4], %s204
        %s206 = sand.u32 %s68, 1
        %s207 = smul.addr %s206, 8
        %s208 = scalar_lea.vmem [#allocation5], %s207
        // Predicated region
        $region29: #{tpu_custom_call.1} parent=23 // pred_check
          %p209 = pneg %p78
        $region30: #{tpu_custom_call.1} parent=23 // pred_check_branch
          %211 = sbr.rel (%p209) target = $region32
        $region31: #{tpu_custom_call.1} parent=23 // pred_region
          %s212 = smul.u32 2, %s23
          %s214 = ssub.s32 128, 128
          %215 = vsyncadd %s205, %s214
          %s216 = smul.addr %s22, 2
          %s217 = sadd.s32 %s212, %s216
          %s218 = smul.addr %s217, 64
          %s219 = scalar_lea.hbm %s1, %s218
          %s221 = sshll.u32 %s208, 4
          %s222 = int_to_ptr.vmem [resolvable:$true] %s221
          %224 = dma.vmem_to_hbm [thread:$0]  %s222, 128, %s219, %s205
        $region32: #{tpu_custom_call.1} parent=23 // pred_fallthru
          _
      $region24: #{tpu_custom_call.1} parent=5 // pred_fallthru
        _
      %p225 = scmp.le.s32.totalorder 2, %s13
      // Predicated region
      $region33: #{tpu_custom_call.1} parent=5 // pred_check
        %p226 = pneg %p225
      $region34: #{tpu_custom_call.1} parent=5 // pred_check_branch
        %228 = sbr.rel (%p226) target = $region36
      $region35: #{tpu_custom_call.1} parent=5 // pred_region
        %s229 = ssub.s32 %s13, 2
        // Predicated region
        $region37: #{tpu_custom_call.1} parent=35 // pred_check
          %p230 = pneg %p84
        $region38: #{tpu_custom_call.1} parent=35 // pred_check_branch
          %232 = sbr.rel (%p230) target = $region40
        $region39: #{tpu_custom_call.1} parent=35 // pred_region
          %s233 = sand.u32 %s69, 1
          %s234 = scalar_lea.sflag [#allocation4], %s233
          %s235 = sand.u32 %s69, 1
          %s236 = smul.addr %s235, 8
          %s237 = scalar_lea.vmem [#allocation5], %s236
          %238 = dma.done %s234, 128
        $region40: #{tpu_custom_call.1} parent=35 // pred_fallthru
          _
      $region36: #{tpu_custom_call.1} parent=5 // pred_fallthru
        _
    $region6: #{tpu_custom_call.1} parent=1 // loop_footer
      %s17 = sadd.s32 1, %s13
    $region7: #{tpu_custom_call.1} parent=1 // loop_footer_branch
      %12 = sbr.rel target = $region3
    $region8: #{tpu_custom_call.1} parent=1 // loop_exit
      _
    %239 = vsyncpa [#allocation3], 1
    %s240 = scalar_lea.sflag [#allocation3], 1
    %241 = vsyncpa %s240, 1
    %242 = vsyncpa [#allocation4], 1
    %s243 = scalar_lea.sflag [#allocation4], 1
    %244 = vsyncpa %s243, 1

</llo_original>
